<compile_context>
chip_gen: v7x
topology: tpu7x:2x2x1
jax: 0.10.0
libtpu: 0.0.40
codegen_flags: <defaults>
</compile_context>

<pallas_src>
import jax
import jax.numpy as jnp
from jax.experimental import pallas as pl
from jax.experimental.pallas import tpu as pltpu


def fused_forward(token_vec, source_mask, c_i,
                  conv1_w, conv1_b, conv2_w, conv2_b,
                  image_vec, W1, b1, W2, b2, Wc, bc,
                  line_spans, block_vecs, line_weights, labels):
    B, S, H = token_vec.shape
    _, L, C = c_i.shape
    K = block_vecs.shape[1]

    BS, BL, BK = B * S, B * L, B * K
    L1 = L - 2                        # Conv1d(k=3, valid) output length
    Lp1 = (L1 - 3) // 2 + 1           # MaxPool1d(3, stride=2) output length
    Lp2 = (Lp1 - 2) // 2 + 1          # MaxPool1d(2, stride=2) output length
    BLp1 = B * Lp1
    NM1 = BL - 4                      # rows of stacked 3-window max
    NM2 = BLp1 - 1                    # rows of stacked 2-window max

    f32, bf16 = jnp.float32, jnp.bfloat16
    SLAB_W = max(H, C, BS, BK, 8)     # common lane width of both slabs

    # ------------------------------------------------------------------
    # Host-side packing: ALL kernel data in two contiguous slabs (2 DMAs).
    # ------------------------------------------------------------------
    def pack(sections, row_mult, dtype):
        parts, offs, off = [], [], 0
        for sec in sections:
            sec = jnp.asarray(sec, dtype)
            r, c = sec.shape
            rp = -(-r // row_mult) * row_mult          # round rows up
            parts.append(jnp.pad(sec, ((0, rp - r), (0, SLAB_W - c))))
            offs.append(off)
            off += rp
        return jnp.concatenate(parts, axis=0), offs

    # block-diagonal, count-normalised mask: code_vec = m_code @ token_flat
    mask = source_mask.astype(f32)                                   # [B, S]
    cnt = jnp.maximum(jnp.sum(mask, axis=1, keepdims=True), 1.0)
    eyeB = jnp.eye(B, dtype=f32)
    m_code = (eyeB[:, :, None] * (mask / cnt)[:, None, :]).reshape(B, BS)

    # per-line mean masks and per-sample weighting (line_vec path)
    s_idx = jnp.arange(S)[None, None, :]
    st = line_spans[:, :, 0][:, :, None]
    en = line_spans[:, :, 1][:, :, None]
    lmask = ((s_idx >= st) & (s_idx < en)).astype(f32)               # [B, K, S]
    lcnt = jnp.maximum(jnp.sum(lmask, axis=2, keepdims=True), 1.0)
    m_line = (eyeB[:, None, :, None] * (lmask / lcnt)[:, :, None, :]
              ).reshape(BK, BS)
    w_local = (eyeB[:, :, None] * (line_weights.astype(f32) / K)[:, None, :]
               ).reshape(B, BK)

    onehot = (labels.reshape(B, 1) == jnp.arange(2)[None, :]).astype(f32)

    def row(v):
        v = jnp.asarray(v, f32).reshape(1, -1)
        return jnp.pad(v, ((0, 0), (0, SLAB_W - v.shape[1])))

    bias_block = jnp.concatenate(
        [row(conv1_b), row(conv2_b), row(b1), row(b2), row(bc)], axis=0)

    data_slab, (O_TOK, O_X, O_BLK, O_IMG, O_MC, O_ML, O_WL, O_BIAS, O_OH) = pack(
        [token_vec.reshape(BS, H), c_i.reshape(BL, C),
         block_vecs.reshape(BK, H), image_vec,
         m_code, m_line, w_local, bias_block, onehot], 8, f32)

    # conv taps in math orientation ([C_in, C_out]); linear weights used as x@W
    w1_taps = jnp.concatenate([conv1_w[:, :, k].T for k in range(3)], axis=0)
    wt_slab, (O_W1, O_W2, O_WM1, O_WM2, O_WC) = pack(
        [w1_taps, conv2_w[:, :, 0].T, W1, W2, Wc], 16, bf16)

    # ------------------------------------------------------------------
    # Single fused kernel (gridless, everything resident in VMEM).
    # ------------------------------------------------------------------
    def kernel(data_ref, wt_ref, out_ref):
        # ---- unpack with static slices (no extra DMAs) ----
        tok = data_ref[O_TOK:O_TOK + BS, 0:H]             # [BS, H]
        xg = data_ref[O_X:O_X + BL, 0:C]                  # [BL, C]
        blk = data_ref[O_BLK:O_BLK + BK, 0:H]             # [BK, H]
        img = data_ref[O_IMG:O_IMG + B, 0:H]              # [B, H]
        mcode = data_ref[O_MC:O_MC + B, 0:BS]             # [B, BS]
        mline = data_ref[O_ML:O_ML + BK, 0:BS]            # [BK, BS]
        wloc = data_ref[O_WL:O_WL + B, 0:BK]              # [B, BK]
        b1c = data_ref[O_BIAS:O_BIAS + 1, 0:C]
        b2c = data_ref[O_BIAS + 1:O_BIAS + 2, 0:C]
        bm1 = data_ref[O_BIAS + 2:O_BIAS + 3, 0:H]
        bm2 = data_ref[O_BIAS + 3:O_BIAS + 4, 0:H]
        bcl = data_ref[O_BIAS + 4:O_BIAS + 5, 0:2]
        oh = data_ref[O_OH:O_OH + B, 0:2]

        w1_0 = wt_ref[O_W1:O_W1 + C, 0:C]
        w1_1 = wt_ref[O_W1 + C:O_W1 + 2 * C, 0:C]
        w1_2 = wt_ref[O_W1 + 2 * C:O_W1 + 3 * C, 0:C]
        w2 = wt_ref[O_W2:O_W2 + C, 0:C]
        wm1 = wt_ref[O_WM1:O_WM1 + H, 0:H]
        wm2 = wt_ref[O_WM2:O_WM2 + H, 0:H]
        wc = wt_ref[O_WC:O_WC + H, 0:2]

        # ---- code_vec: batch-stacked masked mean (one MXU matmul) ----
        code_vec = jnp.dot(mcode, tok, preferred_element_type=f32)       # [B, H]

        # ---- graph branch, batch-stacked ----
        # Conv1d(k=3): three shifted-LHS matmuls summed (no 3C lane concat).
        y1 = (jnp.dot(xg[0:BL - 2].astype(bf16), w1_0, preferred_element_type=f32)
              + jnp.dot(xg[1:BL - 1].astype(bf16), w1_1, preferred_element_type=f32)
              + jnp.dot(xg[2:BL].astype(bf16), w1_2, preferred_element_type=f32)
              + b1c)
        y1 = jnp.maximum(y1, 0.0)                                        # [BL-2, C]

        # MaxPool1d(3, stride=2): shifted maxes + 0/1 selection matmul that
        # also drops the rows straddling sample boundaries.
        m1 = jnp.maximum(jnp.maximum(y1[0:NM1], y1[1:NM1 + 1]), y1[2:NM1 + 2])
        r1 = jax.lax.broadcasted_iota(jnp.int32, (BLp1, NM1), 0)
        c1 = jax.lax.broadcasted_iota(jnp.int32, (BLp1, NM1), 1)
        b_of_r = jnp.zeros((BLp1, NM1), jnp.int32)
        for bb in range(1, B):                      # B static & tiny; no div/mod
            b_of_r = b_of_r + (r1 >= bb * Lp1).astype(jnp.int32)
        sel1 = (c1 == 2 * r1 + b_of_r * (L - 2 * Lp1)).astype(bf16)      # [BLp1, NM1]
        p1 = jnp.dot(sel1, m1.astype(bf16), preferred_element_type=f32)  # [BLp1, C]

        # Conv1d(k=1) + ReLU
        y2 = jnp.maximum(
            jnp.dot(p1.astype(bf16), w2, preferred_element_type=f32) + b2c, 0.0)

        # MaxPool1d(2, stride=2) + sum over pooled time in one selection matmul
        m2 = jnp.maximum(y2[0:NM2], y2[1:NM2 + 1])                       # [NM2, C]
        r2 = jax.lax.broadcasted_iota(jnp.int32, (B, NM2), 0)
        c2 = jax.lax.broadcasted_iota(jnp.int32, (B, NM2), 1)
        rel = c2 - r2 * Lp1
        sel2 = jnp.logical_and(
            jnp.logical_and(rel >= 0, rel < 2 * Lp2),
            jnp.bitwise_and(rel, 1) == 0).astype(bf16)                   # [B, NM2]
        graph_vec = jnp.dot(sel2, m2.astype(bf16), preferred_element_type=f32)

        # ---- local_vec: line means + block vectors, weighted average ----
        line_vecs = jnp.dot(mline, tok, preferred_element_type=f32)      # [BK, H]
        local_vec = jnp.dot(wloc, line_vecs + blk,
                            preferred_element_type=f32)                  # [B, H]

        # ---- fusion + classifier (both matmuls merged into one push) ----
        h1 = jnp.dot(img.astype(bf16), wm1, preferred_element_type=f32) + bm1
        h2 = jnp.dot(local_vec.astype(bf16), wm2, preferred_element_type=f32) + bm2
        fusion = code_vec * graph_vec * h1 * h2                          # [B, H]

        stacked = jnp.concatenate([fusion, code_vec], axis=0)            # [2B, H]
        logits_all = jnp.dot(stacked.astype(bf16), wc,
                             preferred_element_type=f32) + bcl           # [2B, 2]
        logits1 = logits_all[0:B]                                        # classifier(fusion)
        logits2 = logits_all[B:2 * B]                                    # classifier(code_vec)

        def log_softmax(z):
            zs = z - jnp.max(z, axis=-1, keepdims=True)
            return zs - jnp.log(jnp.sum(jnp.exp(zs), axis=-1, keepdims=True))

        lsm1 = log_softmax(logits1)
        lsm2 = log_softmax(logits2)
        prob1 = jnp.exp(lsm1)
        prob2 = jnp.exp(lsm2)

        ce_loss = (-jnp.sum(oh * lsm1, keepdims=True)
                   - jnp.sum(oh * lsm2, keepdims=True)) / (2.0 * B)
        # F.kl_div(log_softmax(p), softmax(q), 'none').sum() = sum q*(log q - log p)
        kl_loss = 0.5 * (jnp.sum(prob2 * (lsm2 - lsm1), keepdims=True)
                         + jnp.sum(prob1 * (lsm1 - lsm2), keepdims=True))
        loss = ce_loss + 0.1 * kl_loss                                   # (1, 1)

        # ---- lane-dense (8, 128) output: 1 full vst + 2 tiny masked stores ----
        out_ref[...] = jnp.zeros_like(out_ref)
        out_ref[0:B, 0:2] = prob1
        out_ref[B:B + 1, 0:2] = jnp.broadcast_to(loss, (1, 2))

    vmem_spec = pl.BlockSpec(memory_space=pltpu.MemorySpace.VMEM)
    packed = pl.pallas_call(
        kernel,
        out_shape=jax.ShapeDtypeStruct((8, 128), jnp.float32),
        in_specs=[vmem_spec, vmem_spec],
        out_specs=vmem_spec,
    )(data_slab, wt_slab)

    prob = packed[0:B, 0:2]
    loss = packed[B, 0]
    return loss, prob


# ----------------------------------------------------------------------------
# Driver with deterministic synthetic inputs.
# ----------------------------------------------------------------------------
if __name__ == "__main__":
    key = jax.random.PRNGKey(0)
    B, S, H = 2, 16, 32       # batch, seq len, hidden_size
    L = 16                    # padded graph node count
    C = H                     # concat_dim = input_dim + output_dim == hidden_size
    K = 3                     # synthetic lines per sample
    pad_id = 0

    ks = jax.random.split(key, 16)

    # Synthetic encoder outputs (code_encoder / image_encoder / GGNN stand-ins).
    source_ids = jax.random.randint(ks[0], (B, S), 0, 50)
    source_ids = source_ids.at[:, :4].set(7)                  # guarantee non-pad
    token_vec = jax.random.normal(ks[1], (B, S, H), jnp.float32)
    source_mask = (source_ids != pad_id).astype(jnp.float32)  # [B, S]

    image_vec = jax.random.normal(ks[2], (B, H), jnp.float32)   # image pooler output
    c_i = jax.random.normal(ks[3], (B, L, C), jnp.float32)      # cat(h_i, x_i)

    # Deterministic parameters (shapes from Model.__init__).
    conv1_w = jax.random.normal(ks[4], (C, C, 3), jnp.float32) * 0.1
    conv1_b = jax.random.normal(ks[5], (C,), jnp.float32) * 0.1
    conv2_w = jax.random.normal(ks[6], (C, C, 1), jnp.float32) * 0.1
    conv2_b = jax.random.normal(ks[7], (C,), jnp.float32) * 0.1

    W1 = jax.random.normal(ks[8], (H, H), jnp.float32) * 0.1      # mlp1
    b1 = jnp.zeros((H,), jnp.float32)
    W2 = jax.random.normal(ks[9], (H, H), jnp.float32) * 0.1      # mlp2
    b2 = jnp.zeros((H,), jnp.float32)
    Wc = jax.random.normal(ks[10], (H, 2), jnp.float32) * 0.1     # classifier
    bc = jnp.zeros((2,), jnp.float32)

    line_spans = jnp.array([[[0, 4], [4, 9], [9, 16]],
                            [[0, 5], [5, 10], [10, 16]]], dtype=jnp.int32)
    block_vecs = jax.random.normal(ks[11], (B, K, H), jnp.float32)
    line_weights = jax.random.uniform(ks[12], (B, K), jnp.float32)

    labels = jnp.array([0, 1], dtype=jnp.int32)

    loss, prob = fused_forward(token_vec, source_mask, c_i,
                               conv1_w, conv1_b, conv2_w, conv2_b,
                               image_vec, W1, b1, W2, b2, Wc, bc,
                               line_spans, block_vecs, line_weights, labels)

    jax.block_until_ready((loss, prob))
    print("KERNEL_OK")
</pallas_src>

<mosaic_0001>
module attributes {stable_mosaic.version = 11 : i64} {
  func.func @kernel(%arg0: memref<120x32xf32, #tpu.memory_space<vmem>>, %arg1: memref<224x32xbf16, #tpu.memory_space<vmem>>, %arg2: memref<8x128xf32, #tpu.memory_space<vmem>>) attributes {dimension_semantics = [], scalar_prefetch = 0 : i64, scratch_operands = 0 : i64, tpu.core_type = #tpu.core_type<tc>} {
    %c0 = arith.constant 0 : index
    %c0_0 = arith.constant 0 : index
    %0 = vector.load %arg0[%c0, %c0_0] : memref<120x32xf32, #tpu.memory_space<vmem>>, vector<32x32xf32>
    %c32 = arith.constant 32 : index
    %c0_1 = arith.constant 0 : index
    %1 = vector.load %arg0[%c32, %c0_1] : memref<120x32xf32, #tpu.memory_space<vmem>>, vector<32x32xf32>
    %c64 = arith.constant 64 : index
    %c0_2 = arith.constant 0 : index
    %2 = vector.load %arg0[%c64, %c0_2] : memref<120x32xf32, #tpu.memory_space<vmem>>, vector<6x32xf32>
    %c72 = arith.constant 72 : index
    %c0_3 = arith.constant 0 : index
    %3 = vector.load %arg0[%c72, %c0_3] : memref<120x32xf32, #tpu.memory_space<vmem>>, vector<2x32xf32>
    %c80 = arith.constant 80 : index
    %c0_4 = arith.constant 0 : index
    %4 = vector.load %arg0[%c80, %c0_4] : memref<120x32xf32, #tpu.memory_space<vmem>>, vector<2x32xf32>
    %c88 = arith.constant 88 : index
    %c0_5 = arith.constant 0 : index
    %5 = vector.load %arg0[%c88, %c0_5] : memref<120x32xf32, #tpu.memory_space<vmem>>, vector<6x32xf32>
    %c96 = arith.constant 96 : index
    %c0_6 = arith.constant 0 : index
    %6 = vector.load %arg0[%c96, %c0_6] : memref<120x32xf32, #tpu.memory_space<vmem>>, vector<2x6xf32>
    %c104 = arith.constant 104 : index
    %c0_7 = arith.constant 0 : index
    %7 = vector.load %arg0[%c104, %c0_7] : memref<120x32xf32, #tpu.memory_space<vmem>>, vector<1x32xf32>
    %c105 = arith.constant 105 : index
    %c0_8 = arith.constant 0 : index
    %8 = vector.load %arg0[%c105, %c0_8] : memref<120x32xf32, #tpu.memory_space<vmem>>, vector<1x32xf32>
    %c106 = arith.constant 106 : index
    %c0_9 = arith.constant 0 : index
    %9 = vector.load %arg0[%c106, %c0_9] : memref<120x32xf32, #tpu.memory_space<vmem>>, vector<1x32xf32>
    %c107 = arith.constant 107 : index
    %c0_10 = arith.constant 0 : index
    %10 = vector.load %arg0[%c107, %c0_10] : memref<120x32xf32, #tpu.memory_space<vmem>>, vector<1x32xf32>
    %c108 = arith.constant 108 : index
    %c0_11 = arith.constant 0 : index
    %11 = vector.load %arg0[%c108, %c0_11] : memref<120x32xf32, #tpu.memory_space<vmem>>, vector<1x2xf32>
    %c112 = arith.constant 112 : index
    %c0_12 = arith.constant 0 : index
    %12 = vector.load %arg0[%c112, %c0_12] : memref<120x32xf32, #tpu.memory_space<vmem>>, vector<2x2xf32>
    %c0_13 = arith.constant 0 : index
    %c0_14 = arith.constant 0 : index
    %13 = vector.load %arg1[%c0_13, %c0_14] : memref<224x32xbf16, #tpu.memory_space<vmem>>, vector<32x32xbf16>
    %c32_15 = arith.constant 32 : index
    %c0_16 = arith.constant 0 : index
    %14 = vector.load %arg1[%c32_15, %c0_16] : memref<224x32xbf16, #tpu.memory_space<vmem>>, vector<32x32xbf16>
    %c64_17 = arith.constant 64 : index
    %c0_18 = arith.constant 0 : index
    %15 = vector.load %arg1[%c64_17, %c0_18] : memref<224x32xbf16, #tpu.memory_space<vmem>>, vector<32x32xbf16>
    %c96_19 = arith.constant 96 : index
    %c0_20 = arith.constant 0 : index
    %16 = vector.load %arg1[%c96_19, %c0_20] : memref<224x32xbf16, #tpu.memory_space<vmem>>, vector<32x32xbf16>
    %c128 = arith.constant 128 : index
    %c0_21 = arith.constant 0 : index
    %17 = vector.load %arg1[%c128, %c0_21] : memref<224x32xbf16, #tpu.memory_space<vmem>>, vector<32x32xbf16>
    %c160 = arith.constant 160 : index
    %c0_22 = arith.constant 0 : index
    %18 = vector.load %arg1[%c160, %c0_22] : memref<224x32xbf16, #tpu.memory_space<vmem>>, vector<32x32xbf16>
    %c192 = arith.constant 192 : index
    %c0_23 = arith.constant 0 : index
    %19 = vector.load %arg1[%c192, %c0_23] : memref<224x32xbf16, #tpu.memory_space<vmem>>, vector<32x2xbf16>
    %cst = arith.constant dense<0.000000e+00> : vector<2x32xf32>
    %20 = tpu.matmul %4, %0, %cst {dimension_numbers = #tpu.dot_dimension_numbers<[1], [0], [0], [1], [0, 0, 1, 1], [], []>} : vector<2x32xf32>, vector<32x32xf32>, vector<2x32xf32> -> vector<2x32xf32>
    %21 = vector.extract_strided_slice %1 {offsets = [0, 0], sizes = [30, 32], strides = [1, 1]} : vector<32x32xf32> to vector<30x32xf32>
    %22 = arith.truncf %21 : vector<30x32xf32> to vector<30x32xbf16>
    %cst_24 = arith.constant dense<0.000000e+00> : vector<30x32xf32>
    %23 = tpu.matmul %22, %13, %cst_24 {dimension_numbers = #tpu.dot_dimension_numbers<[1], [0], [0], [1], [0, 0, 1, 1], [], []>} : vector<30x32xbf16>, vector<32x32xbf16>, vector<30x32xf32> -> vector<30x32xf32>
    %24 = vector.extract_strided_slice %1 {offsets = [1, 0], sizes = [30, 32], strides = [1, 1]} : vector<32x32xf32> to vector<30x32xf32>
    %25 = arith.truncf %24 : vector<30x32xf32> to vector<30x32xbf16>
    %cst_25 = arith.constant dense<0.000000e+00> : vector<30x32xf32>
    %26 = tpu.matmul %25, %14, %cst_25 {dimension_numbers = #tpu.dot_dimension_numbers<[1], [0], [0], [1], [0, 0, 1, 1], [], []>} : vector<30x32xbf16>, vector<32x32xbf16>, vector<30x32xf32> -> vector<30x32xf32>
    %27 = arith.addf %23, %26 : vector<30x32xf32>
    %28 = vector.extract_strided_slice %1 {offsets = [2, 0], sizes = [30, 32], strides = [1, 1]} : vector<32x32xf32> to vector<30x32xf32>
    %29 = arith.truncf %28 : vector<30x32xf32> to vector<30x32xbf16>
    %cst_26 = arith.constant dense<0.000000e+00> : vector<30x32xf32>
    %30 = tpu.matmul %29, %15, %cst_26 {dimension_numbers = #tpu.dot_dimension_numbers<[1], [0], [0], [1], [0, 0, 1, 1], [], []>} : vector<30x32xbf16>, vector<32x32xbf16>, vector<30x32xf32> -> vector<30x32xf32>
    %31 = arith.addf %27, %30 : vector<30x32xf32>
    %32 = vector.broadcast %7 : vector<1x32xf32> to vector<30x32xf32>
    %33 = arith.addf %31, %32 : vector<30x32xf32>
    %cst_27 = arith.constant 0.000000e+00 : f32
    %34 = vector.broadcast %cst_27 : f32 to vector<30x32xf32>
    %35 = arith.maximumf %33, %34 : vector<30x32xf32>
    %36 = vector.extract_strided_slice %35 {offsets = [0, 0], sizes = [28, 32], strides = [1, 1]} : vector<30x32xf32> to vector<28x32xf32>
    %37 = vector.extract_strided_slice %35 {offsets = [1, 0], sizes = [28, 32], strides = [1, 1]} : vector<30x32xf32> to vector<28x32xf32>
    %38 = arith.maximumf %36, %37 : vector<28x32xf32>
    %39 = vector.extract_strided_slice %35 {offsets = [2, 0], sizes = [28, 32], strides = [1, 1]} : vector<30x32xf32> to vector<28x32xf32>
    %40 = arith.maximumf %38, %39 : vector<28x32xf32>
    %41 = tpu.iota {dimensions = array<i32: 0>} : vector<12x28xi32>
    %42 = tpu.iota {dimensions = array<i32: 1>} : vector<12x28xi32>
    %c0_i32 = arith.constant 0 : i32
    %43 = vector.broadcast %c0_i32 : i32 to vector<12x28xi32>
    %c6_i32 = arith.constant 6 : i32
    %44 = vector.broadcast %c6_i32 : i32 to vector<12x28xi32>
    %45 = arith.cmpi sge, %41, %44 : vector<12x28xi32>
    %46 = arith.extui %45 : vector<12x28xi1> to vector<12x28xi32>
    %47 = arith.addi %43, %46 : vector<12x28xi32>
    %c2_i32 = arith.constant 2 : i32
    %48 = vector.broadcast %c2_i32 : i32 to vector<12x28xi32>
    %49 = arith.muli %48, %41 : vector<12x28xi32>
    %c4_i32 = arith.constant 4 : i32
    %50 = vector.broadcast %c4_i32 : i32 to vector<12x28xi32>
    %51 = arith.muli %47, %50 : vector<12x28xi32>
    %52 = arith.addi %49, %51 : vector<12x28xi32>
    %53 = arith.cmpi eq, %42, %52 : vector<12x28xi32>
    %54 = arith.extui %53 : vector<12x28xi1> to vector<12x28xi32>
    %55 = arith.sitofp %54 : vector<12x28xi32> to vector<12x28xf32>
    %56 = arith.truncf %55 : vector<12x28xf32> to vector<12x28xbf16>
    %57 = arith.truncf %40 : vector<28x32xf32> to vector<28x32xbf16>
    %cst_28 = arith.constant dense<0.000000e+00> : vector<12x32xf32>
    %58 = tpu.matmul %56, %57, %cst_28 {dimension_numbers = #tpu.dot_dimension_numbers<[1], [0], [0], [1], [0, 0, 1, 1], [], []>} : vector<12x28xbf16>, vector<28x32xbf16>, vector<12x32xf32> -> vector<12x32xf32>
    %59 = arith.truncf %58 : vector<12x32xf32> to vector<12x32xbf16>
    %cst_29 = arith.constant dense<0.000000e+00> : vector<12x32xf32>
    %60 = tpu.matmul %59, %16, %cst_29 {dimension_numbers = #tpu.dot_dimension_numbers<[1], [0], [0], [1], [0, 0, 1, 1], [], []>} : vector<12x32xbf16>, vector<32x32xbf16>, vector<12x32xf32> -> vector<12x32xf32>
    %61 = vector.broadcast %8 : vector<1x32xf32> to vector<12x32xf32>
    %62 = arith.addf %60, %61 : vector<12x32xf32>
    %cst_30 = arith.constant 0.000000e+00 : f32
    %63 = vector.broadcast %cst_30 : f32 to vector<12x32xf32>
    %64 = arith.maximumf %62, %63 : vector<12x32xf32>
    %65 = vector.extract_strided_slice %64 {offsets = [0, 0], sizes = [11, 32], strides = [1, 1]} : vector<12x32xf32> to vector<11x32xf32>
    %66 = vector.extract_strided_slice %64 {offsets = [1, 0], sizes = [11, 32], strides = [1, 1]} : vector<12x32xf32> to vector<11x32xf32>
    %67 = arith.maximumf %65, %66 : vector<11x32xf32>
    %68 = tpu.iota {dimensions = array<i32: 0>} : vector<2x11xi32>
    %69 = tpu.iota {dimensions = array<i32: 1>} : vector<2x11xi32>
    %c6_i32_31 = arith.constant 6 : i32
    %70 = vector.broadcast %c6_i32_31 : i32 to vector<2x11xi32>
    %71 = arith.muli %68, %70 : vector<2x11xi32>
    %72 = arith.subi %69, %71 : vector<2x11xi32>
    %c0_i32_32 = arith.constant 0 : i32
    %73 = vector.broadcast %c0_i32_32 : i32 to vector<2x11xi32>
    %74 = arith.cmpi sge, %72, %73 : vector<2x11xi32>
    %c6_i32_33 = arith.constant 6 : i32
    %75 = vector.broadcast %c6_i32_33 : i32 to vector<2x11xi32>
    %76 = arith.cmpi slt, %72, %75 : vector<2x11xi32>
    %77 = arith.andi %74, %76 : vector<2x11xi1>
    %c1_i32 = arith.constant 1 : i32
    %78 = vector.broadcast %c1_i32 : i32 to vector<2x11xi32>
    %79 = arith.andi %72, %78 : vector<2x11xi32>
    %c0_i32_34 = arith.constant 0 : i32
    %80 = vector.broadcast %c0_i32_34 : i32 to vector<2x11xi32>
    %81 = arith.cmpi eq, %79, %80 : vector<2x11xi32>
    %82 = arith.andi %77, %81 : vector<2x11xi1>
    %83 = arith.extui %82 : vector<2x11xi1> to vector<2x11xi32>
    %84 = arith.sitofp %83 : vector<2x11xi32> to vector<2x11xf32>
    %85 = arith.truncf %84 : vector<2x11xf32> to vector<2x11xbf16>
    %86 = arith.truncf %67 : vector<11x32xf32> to vector<11x32xbf16>
    %cst_35 = arith.constant dense<0.000000e+00> : vector<2x32xf32>
    %87 = tpu.matmul %85, %86, %cst_35 {dimension_numbers = #tpu.dot_dimension_numbers<[1], [0], [0], [1], [0, 0, 1, 1], [], []>} : vector<2x11xbf16>, vector<11x32xbf16>, vector<2x32xf32> -> vector<2x32xf32>
    %cst_36 = arith.constant dense<0.000000e+00> : vector<6x32xf32>
    %88 = tpu.matmul %5, %0, %cst_36 {dimension_numbers = #tpu.dot_dimension_numbers<[1], [0], [0], [1], [0, 0, 1, 1], [], []>} : vector<6x32xf32>, vector<32x32xf32>, vector<6x32xf32> -> vector<6x32xf32>
    %89 = arith.addf %88, %2 : vector<6x32xf32>
    %cst_37 = arith.constant dense<0.000000e+00> : vector<2x32xf32>
    %90 = tpu.matmul %6, %89, %cst_37 {dimension_numbers = #tpu.dot_dimension_numbers<[1], [0], [0], [1], [0, 0, 1, 1], [], []>} : vector<2x6xf32>, vector<6x32xf32>, vector<2x32xf32> -> vector<2x32xf32>
    %91 = arith.truncf %3 : vector<2x32xf32> to vector<2x32xbf16>
    %cst_38 = arith.constant dense<0.000000e+00> : vector<2x32xf32>
    %92 = tpu.matmul %91, %17, %cst_38 {dimension_numbers = #tpu.dot_dimension_numbers<[1], [0], [0], [1], [0, 0, 1, 1], [], []>} : vector<2x32xbf16>, vector<32x32xbf16>, vector<2x32xf32> -> vector<2x32xf32>
    %93 = vector.broadcast %9 : vector<1x32xf32> to vector<2x32xf32>
    %94 = arith.addf %92, %93 : vector<2x32xf32>
    %95 = arith.truncf %90 : vector<2x32xf32> to vector<2x32xbf16>
    %cst_39 = arith.constant dense<0.000000e+00> : vector<2x32xf32>
    %96 = tpu.matmul %95, %18, %cst_39 {dimension_numbers = #tpu.dot_dimension_numbers<[1], [0], [0], [1], [0, 0, 1, 1], [], []>} : vector<2x32xbf16>, vector<32x32xbf16>, vector<2x32xf32> -> vector<2x32xf32>
    %97 = vector.broadcast %10 : vector<1x32xf32> to vector<2x32xf32>
    %98 = arith.addf %96, %97 : vector<2x32xf32>
    %99 = arith.mulf %20, %87 : vector<2x32xf32>
    %100 = arith.mulf %99, %94 : vector<2x32xf32>
    %101 = arith.mulf %100, %98 : vector<2x32xf32>
    %102 = tpu.concatenate %101, %20 in 0 : vector<2x32xf32>, vector<2x32xf32> -> vector<4x32xf32>
    %103 = arith.truncf %102 : vector<4x32xf32> to vector<4x32xbf16>
    %cst_40 = arith.constant dense<0.000000e+00> : vector<4x2xf32>
    %104 = tpu.matmul %103, %19, %cst_40 {dimension_numbers = #tpu.dot_dimension_numbers<[1], [0], [0], [1], [0, 0, 1, 1], [], []>} : vector<4x32xbf16>, vector<32x2xbf16>, vector<4x2xf32> -> vector<4x2xf32>
    %105 = vector.broadcast %11 : vector<1x2xf32> to vector<4x2xf32>
    %106 = arith.addf %104, %105 : vector<4x2xf32>
    %107 = vector.extract_strided_slice %106 {offsets = [0, 0], sizes = [2, 2], strides = [1, 1]} : vector<4x2xf32> to vector<2x2xf32>
    %108 = vector.extract_strided_slice %106 {offsets = [2, 0], sizes = [2, 2], strides = [1, 1]} : vector<4x2xf32> to vector<2x2xf32>
    %cst_41 = arith.constant dense<0xFF800000> : vector<2xf32>
    %109 = vector.multi_reduction <maximumf>, %107, %cst_41 [1] : vector<2x2xf32> to vector<2xf32>
    %110 = vector.shape_cast %109 : vector<2xf32> to vector<2x1xf32>
    %111 = vector.broadcast %110 : vector<2x1xf32> to vector<2x2xf32>
    %112 = arith.subf %107, %111 : vector<2x2xf32>
    %113 = math.exp %112 : vector<2x2xf32>
    %cst_42 = arith.constant dense<0.000000e+00> : vector<2xf32>
    %114 = vector.multi_reduction <add>, %113, %cst_42 [1] : vector<2x2xf32> to vector<2xf32>
    %115 = vector.shape_cast %114 : vector<2xf32> to vector<2x1xf32>
    %116 = math.log %115 : vector<2x1xf32>
    %117 = vector.broadcast %116 : vector<2x1xf32> to vector<2x2xf32>
    %118 = arith.subf %112, %117 : vector<2x2xf32>
    %cst_43 = arith.constant dense<0xFF800000> : vector<2xf32>
    %119 = vector.multi_reduction <maximumf>, %108, %cst_43 [1] : vector<2x2xf32> to vector<2xf32>
    %120 = vector.shape_cast %119 : vector<2xf32> to vector<2x1xf32>
    %121 = vector.broadcast %120 : vector<2x1xf32> to vector<2x2xf32>
    %122 = arith.subf %108, %121 : vector<2x2xf32>
    %123 = math.exp %122 : vector<2x2xf32>
    %cst_44 = arith.constant dense<0.000000e+00> : vector<2xf32>
    %124 = vector.multi_reduction <add>, %123, %cst_44 [1] : vector<2x2xf32> to vector<2xf32>
    %125 = vector.shape_cast %124 : vector<2xf32> to vector<2x1xf32>
    %126 = math.log %125 : vector<2x1xf32>
    %127 = vector.broadcast %126 : vector<2x1xf32> to vector<2x2xf32>
    %128 = arith.subf %122, %127 : vector<2x2xf32>
    %129 = math.exp %118 : vector<2x2xf32>
    %130 = math.exp %128 : vector<2x2xf32>
    %131 = arith.mulf %12, %118 : vector<2x2xf32>
    %132 = vector.shape_cast %131 : vector<2x2xf32> to vector<1x2x2xf32>
    %cst_45 = arith.constant dense<0.000000e+00> : vector<1xf32>
    %133 = vector.multi_reduction <add>, %132, %cst_45 [1, 2] : vector<1x2x2xf32> to vector<1xf32>
    %134 = vector.shape_cast %133 : vector<1xf32> to vector<1x1x1xf32>
    %135 = vector.extract %134[0, 0, 0] : f32 from vector<1x1x1xf32>
    %136 = vector.broadcast %135 : f32 to vector<1x1xf32>
    %cst_46 = arith.constant 0.000000e+00 : f32
    %137 = vector.broadcast %cst_46 : f32 to vector<1x1xf32>
    %138 = arith.subf %137, %136 : vector<1x1xf32>
    %139 = arith.mulf %12, %128 : vector<2x2xf32>
    %140 = vector.shape_cast %139 : vector<2x2xf32> to vector<1x2x2xf32>
    %cst_47 = arith.constant dense<0.000000e+00> : vector<1xf32>
    %141 = vector.multi_reduction <add>, %140, %cst_47 [1, 2] : vector<1x2x2xf32> to vector<1xf32>
    %142 = vector.shape_cast %141 : vector<1xf32> to vector<1x1x1xf32>
    %143 = vector.extract %142[0, 0, 0] : f32 from vector<1x1x1xf32>
    %144 = vector.broadcast %143 : f32 to vector<1x1xf32>
    %145 = arith.subf %138, %144 : vector<1x1xf32>
    %cst_48 = arith.constant 4.000000e+00 : f32
    %146 = vector.broadcast %cst_48 : f32 to vector<1x1xf32>
    %147 = arith.divf %145, %146 : vector<1x1xf32>
    %148 = arith.subf %128, %118 : vector<2x2xf32>
    %149 = arith.mulf %130, %148 : vector<2x2xf32>
    %150 = vector.shape_cast %149 : vector<2x2xf32> to vector<1x2x2xf32>
    %cst_49 = arith.constant dense<0.000000e+00> : vector<1xf32>
    %151 = vector.multi_reduction <add>, %150, %cst_49 [1, 2] : vector<1x2x2xf32> to vector<1xf32>
    %152 = vector.shape_cast %151 : vector<1xf32> to vector<1x1x1xf32>
    %153 = vector.extract %152[0, 0, 0] : f32 from vector<1x1x1xf32>
    %154 = vector.broadcast %153 : f32 to vector<1x1xf32>
    %155 = arith.subf %118, %128 : vector<2x2xf32>
    %156 = arith.mulf %129, %155 : vector<2x2xf32>
    %157 = vector.shape_cast %156 : vector<2x2xf32> to vector<1x2x2xf32>
    %cst_50 = arith.constant dense<0.000000e+00> : vector<1xf32>
    %158 = vector.multi_reduction <add>, %157, %cst_50 [1, 2] : vector<1x2x2xf32> to vector<1xf32>
    %159 = vector.shape_cast %158 : vector<1xf32> to vector<1x1x1xf32>
    %160 = vector.extract %159[0, 0, 0] : f32 from vector<1x1x1xf32>
    %161 = vector.broadcast %160 : f32 to vector<1x1xf32>
    %162 = arith.addf %154, %161 : vector<1x1xf32>
    %cst_51 = arith.constant 5.000000e-01 : f32
    %163 = vector.broadcast %cst_51 : f32 to vector<1x1xf32>
    %164 = arith.mulf %163, %162 : vector<1x1xf32>
    %cst_52 = arith.constant 1.000000e-01 : f32
    %165 = vector.broadcast %cst_52 : f32 to vector<1x1xf32>
    %166 = arith.mulf %165, %164 : vector<1x1xf32>
    %167 = arith.addf %147, %166 : vector<1x1xf32>
    %cst_53 = arith.constant 0.000000e+00 : f32
    %168 = vector.broadcast %cst_53 : f32 to vector<8x128xf32>
    %c0_54 = arith.constant 0 : index
    %c0_55 = arith.constant 0 : index
    %169 = vector.load %arg2[%c0_54, %c0_55] : memref<8x128xf32, #tpu.memory_space<vmem>>, vector<8x128xf32>
    tpu.vector_store %arg2[%c0_54, %c0_55], %168 {strides = array<i32>} : memref<8x128xf32, #tpu.memory_space<vmem>>, vector<8x128xf32>,
    %c0_56 = arith.constant 0 : index
    %c0_57 = arith.constant 0 : index
    %170 = vector.load %arg2[%c0_56, %c0_57] : memref<8x128xf32, #tpu.memory_space<vmem>>, vector<2x2xf32>
    tpu.vector_store %arg2[%c0_56, %c0_57], %129 {strides = array<i32>} : memref<8x128xf32, #tpu.memory_space<vmem>>, vector<2x2xf32>,
    %171 = vector.shape_cast %167 : vector<1x1xf32> to vector<1x1xf32>
    %172 = vector.broadcast %171 : vector<1x1xf32> to vector<1x2xf32>
    %c2 = arith.constant 2 : index
    %c0_58 = arith.constant 0 : index
    %173 = vector.load %arg2[%c2, %c0_58] : memref<8x128xf32, #tpu.memory_space<vmem>>, vector<1x2xf32>
    tpu.vector_store %arg2[%c2, %c0_58], %172 {strides = array<i32>} : memref<8x128xf32, #tpu.memory_space<vmem>>, vector<1x2xf32>,
    return
  }
}

</mosaic_0001>

<llo_original>
// kernel: tpu_custom_call.1
$region0: #{tpu_custom_call.1}
  #allocation0 [shape = 'u32[]', space=smem, size = 0x4, offset = 0x4, fixed_abs, tag = 'smem constant byte address 0x4 - core index']
  #allocation1 [shape = 'u32[144,128]{1,0:T(1,128)}', space=vmem, size = 0x12000, scoped, tag = 'internal scratch']
  %s0 = inlined_call_operand.vmem [shape: f32[120,32], index: 0, kind: input, shape index: {}]
  %s1 = inlined_call_operand.vmem [shape: bf16[224,32], index: 1, kind: input, shape index: {}]
  %s2 = inlined_call_operand.hbm [shape: f32[8,128], index: 2, kind: output, shape index: {}]
  %s3 = sld [smem:[#allocation0]]
  $region18: #{tpu_custom_call.1} parent=0
    _
  %s5 = ssub.s32 1, %s3
  %s6 = scalar_select 0, %s5, %s3
  $region1: #{tpu_custom_call.1} parent=0
    #allocation2 [shape = 'u8[4096]{0}', space=vmem, size = 0x1000, scoped, tag = 'output window, operand 0, single buffered']
    #allocation3 [shape = 's32[1]{0}', space=sflag, size = 0x4, scoped, tag = 'scoped memory for tpu_custom_call.1']
    %7 = vsyncpa [#allocation3], 0
    // Predicated region
    $region2: #{tpu_custom_call.1} parent=1 // pred_check
      _
    $region3: #{tpu_custom_call.1} parent=1 // pred_check_branch
      %9 = sbr.rel (0) target = $region5
    $region4: #{tpu_custom_call.1} parent=1 // pred_region
      _
    $region5: #{tpu_custom_call.1} parent=1 // pred_fallthru
      _
    // Predicated region
    $region6: #{tpu_custom_call.1} parent=1 // pred_check
      _
    $region7: #{tpu_custom_call.1} parent=1 // pred_check_branch
      %11 = sbr.rel (0) target = $region9
    $region8: #{tpu_custom_call.1} parent=1 // pred_region
      _
    $region9: #{tpu_custom_call.1} parent=1 // pred_fallthru
      _
    %v13 = vld [vmem:[%s0] sm:$0xff]
    %v14 = vld [vmem:[%s0 + $0x8] sm:$0xff]
    %v15 = vld [vmem:[%s0 + $0x10] sm:$0xff]
    %v16 = vld [vmem:[%s0 + $0x18] sm:$0xff]
    %v17 = vld [vmem:[%s0 + $0x20] sm:$0xff]
    %v18 = vld [vmem:[%s0 + $0x28] sm:$0xff]
    %v19 = vld [vmem:[%s0 + $0x30] sm:$0xff]
    %v20 = vld [vmem:[%s0 + $0x38] sm:$0xff]
    %v21 = vld [vmem:[%s0 + $0x40] sm:$0x3f]
    %v22 = vld [vmem:[%s0 + $0x48] sm:$0x3]
    %v23 = vld [vmem:[%s0 + $0x50] sm:$0x3]
    %v24 = vld [vmem:[%s0 + $0x58] sm:$0x3f]
    %v25 = vld [vmem:[%s0 + $0x60] sm:$0x3]
    %v26 = vld [vmem:[%s0 + $0x68] sm:$0x1]
    %v27 = vld [vmem:[%s0 + $0x69] sm:$0x1]
    %v28 = vld [vmem:[%s0 + $0x6a] sm:$0x1]
    %v29 = vld [vmem:[%s0 + $0x6b] sm:$0x1]
    %v30 = vld [vmem:[%s0 + $0x6c] sm:$0x1]
    %v31 = vld [vmem:[%s0 + $0x70] sm:$0x3]
    %v32 = vld [vmem:[%s1] sm:$0xf]
    %v33 = vld [vmem:[%s1 + $0x4] sm:$0xf]
    %v34 = vld [vmem:[%s1 + $0x8] sm:$0xf]
    %v35 = vld [vmem:[%s1 + $0xc] sm:$0xf]
    %v36 = vld [vmem:[%s1 + $0x10] sm:$0xf]
    %v37 = vld [vmem:[%s1 + $0x14] sm:$0xf]
    %v38 = vld [vmem:[%s1 + $0x18] sm:$0xf]
    %v39 = vld [vmem:[%s1 + $0x1c] sm:$0xf]
    %v40 = vld [vmem:[%s1 + $0x20] sm:$0xf]
    %v41 = vld [vmem:[%s1 + $0x24] sm:$0xf]
    %v42 = vld [vmem:[%s1 + $0x28] sm:$0xf]
    %v43 = vld [vmem:[%s1 + $0x2c] sm:$0xf]
    %v44 = vld [vmem:[%s1 + $0x30] sm:$0xf]
    %v45 = vld [vmem:[%s1 + $0x34] sm:$0xf]
    %v46 = vld [vmem:[%s1 + $0x38] sm:$0xf]
    %v47 = vld [vmem:[%s1 + $0x3c] sm:$0xf]
    %v48 = vld [vmem:[%s1 + $0x40] sm:$0xf]
    %v49 = vld [vmem:[%s1 + $0x44] sm:$0xf]
    %v50 = vld [vmem:[%s1 + $0x48] sm:$0xf]
    %v51 = vld [vmem:[%s1 + $0x4c] sm:$0xf]
    %v52 = vld [vmem:[%s1 + $0x50] sm:$0xf]
    %v53 = vld [vmem:[%s1 + $0x54] sm:$0xf]
    %v54 = vld [vmem:[%s1 + $0x58] sm:$0xf]
    %v55 = vld [vmem:[%s1 + $0x5c] sm:$0xf]
    %v56 = vld [vmem:[%s1 + $0x60] sm:$0xf]
    %v57 = vld [vmem:[%s1 + $0x64] sm:$0xf]
    %v58 = vld [vmem:[%s1 + $0x68] sm:$0xf]
    %v59 = vld [vmem:[%s1 + $0x6c] sm:$0xf]
    %vm60 = vcmask 261120
    %v62 = vsel %vm60, %v23, 0
    %64 = vmatprep.subr.mxu0 0.0
    %65 = vmatpush1.msra.mxu0 %v13
    %66 = vmatprep.subr.mxu0 0.0
    %67 = vmatpush1.msra.mxu0 %v14
    %68 = vmatprep.subr.mxu0 0.0
    %69 = vmatpush1.msra.mxu0 %v15
    %70 = vmatprep.subr.mxu0 0.0
    %71 = vmatpush1.msra.mxu0 %v16
    %72 = vmatprep.subr.mxu0 0.0
    %73 = vmatpush1.msra.mxu0 0.0
    %74 = vmatprep.subr.mxu0 0.0
    %75 = vmatpush1.msra.mxu0 0.0
    %76 = vmatprep.subr.mxu0 0.0
    %77 = vmatpush1.msra.mxu0 0.0
    %78 = vmatprep.subr.mxu0 0.0
    %79 = vmatpush1.msra.mxu0 0.0
    %80 = vmatprep.subr.mxu0 0.0
    %81 = vmatpush1.msra.mxu0 0.0
    %82 = vmatprep.subr.mxu0 0.0
    %83 = vmatpush1.msra.mxu0 0.0
    %84 = vmatprep.subr.mxu0 0.0
    %85 = vmatpush1.msra.mxu0 0.0
    %86 = vmatprep.subr.mxu0 0.0
    %87 = vmatpush1.msra.mxu0 0.0
    %88 = vmatprep.subr.mxu0 0.0
    %89 = vmatpush1.msra.mxu0 0.0
    %90 = vmatprep.subr.mxu0 0.0
    %91 = vmatpush1.msra.mxu0 0.0
    %92 = vmatprep.subr.mxu0 0.0
    %93 = vmatpush1.msra.mxu0 0.0
    %94 = vmatprep.subr.mxu0 0.0
    %95 = vmatpush1.msra.mxu0 0.0
    %96 = vmatprep.subr.mxu0 0.0
    %97 = vmatpush1.msra.mxu0 0.0
    %98 = vmatprep.subr.mxu0 0.0
    %99 = vmatpush1.msra.mxu0 0.0
    %100 = vmatprep.subr.mxu0 0.0
    %101 = vmatpush1.msra.mxu0 0.0
    %102 = vmatprep.subr.mxu0 0.0
    %103 = vmatpush1.msra.mxu0 0.0
    %104 = vmatprep.subr.mxu0 0.0
    %105 = vmatpush1.msra.mxu0 0.0
    %106 = vmatprep.subr.mxu0 0.0
    %107 = vmatpush1.msra.mxu0 0.0
    %108 = vmatprep.subr.mxu0 0.0
    %109 = vmatpush1.msra.mxu0 0.0
    %110 = vmatprep.subr.mxu0 0.0
    %111 = vmatpush1.msra.mxu0 0.0
    %112 = vmatprep.subr.mxu0 0.0
    %113 = vmatpush1.msra.mxu0 0.0
    %114 = vmatprep.subr.mxu0 0.0
    %115 = vmatpush1.msra.mxu0 0.0
    %116 = vmatprep.subr.mxu0 0.0
    %117 = vmatpush1.msra.mxu0 0.0
    %118 = vmatprep.subr.mxu0 0.0
    %119 = vmatpush1.msra.mxu0 0.0
    %120 = vmatprep.subr.mxu0 0.0
    %121 = vmatpush1.msra.mxu0 0.0
    %122 = vmatprep.subr.mxu0 0.0
    %123 = vmatpush1.msra.mxu0 0.0
    %124 = vmatprep.subr.mxu0 0.0
    %125 = vmatpush1.msra.mxu0 0.0
    %126 = vmatprep.subr.mxu0 0.0
    %127 = vmatpush1.msra.mxu0 0.0
    %128 = vmatprep.mubr.f32.mxu0 0.0
    %129 = vmatmul.mubr.f32.gmra.mrb[0].mxu0 %v62
    %v130 = vpop.f32.mrb[0].mxu0
    %v131 = vadd.f32 0.0, %v130
    %v132 = vpop.f32.mrb[0].mxu0
    %133 = vdwg.mxu0
    %v134 = vpack.c.bf16 %v18, %v17
    %v135 = vpack.c.bf16 %v20, %v19
    %vm136 = vsmask.f32 7424
    %v138 = vshrl.u32 %v134, 16
    %v140 = vshll.u32 %v134, 16
    %v142 = vrot.slane %v140, 1
    %v143 = vor.u32 %v138, %v142
    %v145 = vshll.u32 %v135, 16
    %v147 = vrot.slane %v145, 1
    %v148 = vsel %vm136, %v143, %v147
    %v149 = vshrl.u32 %v135, 16
    %v151 = vor.u32 %v149, %v147
    %v156 = vunpack.c.l.b16 %v36
    %v157 = vunpack.c.l.b16 %v37
    %v158 = vunpack.c.l.b16 %v38
    %v159 = vunpack.c.l.b16 %v39
    %v160 = vpack.c.b16 %v157, %v156
    %v161 = vpack.c.b16 %v159, %v158
    %v165 = vsel %vm60, %v148, 0
    %v168 = vsel %vm60, %v151, 0
    %170 = vmatprep.subr.bf16.mxu0 0
    %171 = vmatpush1.bf16.msra.mxu0 %v160
    %172 = vmatprep.subr.bf16.mxu0 0
    %173 = vmatpush1.bf16.msra.mxu0 %v161
    %174 = vmatprep.subr.bf16.mxu0 0
    %175 = vmatpush1.bf16.msra.mxu0 0
    %176 = vmatprep.subr.bf16.mxu0 0
    %177 = vmatpush1.bf16.msra.mxu0 0
    %178 = vmatprep.subr.bf16.mxu0 0
    %179 = vmatpush1.bf16.msra.mxu0 0
    %180 = vmatprep.subr.bf16.mxu0 0
    %181 = vmatpush1.bf16.msra.mxu0 0
    %182 = vmatprep.subr.bf16.mxu0 0
    %183 = vmatpush1.bf16.msra.mxu0 0
    %184 = vmatprep.subr.bf16.mxu0 0
    %185 = vmatpush1.bf16.msra.mxu0 0
    %186 = vmatprep.subr.bf16.mxu0 0
    %187 = vmatpush1.bf16.msra.mxu0 0
    %188 = vmatprep.subr.bf16.mxu0 0
    %189 = vmatpush1.bf16.msra.mxu0 0
    %190 = vmatprep.subr.bf16.mxu0 0
    %191 = vmatpush1.bf16.msra.mxu0 0
    %192 = vmatprep.subr.bf16.mxu0 0
    %193 = vmatpush1.bf16.msra.mxu0 0
    %194 = vmatprep.subr.bf16.mxu0 0
    %195 = vmatpush1.bf16.msra.mxu0 0
    %196 = vmatprep.subr.bf16.mxu0 0
    %197 = vmatpush1.bf16.msra.mxu0 0
    %198 = vmatprep.subr.bf16.mxu0 0
    %199 = vmatpush1.bf16.msra.mxu0 0
    %200 = vmatprep.subr.bf16.mxu0 0
    %201 = vmatpush1.bf16.msra.mxu0 0
    %202 = vmatprep.mubr.bf16.mxu0 0
    %203 = vmatmul.mubr.bf16.gmra.mrb[0].mxu0 %v165
    %v204 = vpop.f32.mrb[0].mxu0
    %v205 = vadd.f32 0.0, %v204
    %v206 = vpop.f32.mrb[0].mxu0
    %v207 = vpop.f32.mrb[0].mxu0
    %v208 = vadd.f32 0.0, %v207
    %v209 = vpop.f32.mrb[0].mxu0
    %210 = vmatprep.mubr.bf16.mxu0 0
    %211 = vmatmul.mubr.bf16.gmra.mrb[0].mxu0 %v168
    %v212 = vpop.f32.mrb[0].mxu0
    %v213 = vadd.f32 0.0, %v212
    %v214 = vpop.f32.mrb[0].mxu0
    %v215 = vpop.f32.mrb[0].mxu0
    %v216 = vadd.f32 0.0, %v215
    %v217 = vpop.f32.mrb[0].mxu0
    %218 = vdwg.mxu0
    %v223 = vunpack.c.l.b16 %v32
    %v224 = vunpack.c.l.b16 %v33
    %v225 = vunpack.c.l.b16 %v34
    %v226 = vunpack.c.l.b16 %v35
    %v227 = vpack.c.b16 %v224, %v223
    %v228 = vpack.c.b16 %v226, %v225
    %v231 = vsel %vm60, %v134, 0
    %v233 = vsel %vm60, %v135, 0
    %235 = vmatprep.subr.bf16.mxu0 0
    %236 = vmatpush1.bf16.msra.mxu0 %v227
    %237 = vmatprep.subr.bf16.mxu0 0
    %238 = vmatpush1.bf16.msra.mxu0 %v228
    %239 = vmatprep.subr.bf16.mxu0 0
    %240 = vmatpush1.bf16.msra.mxu0 0
    %241 = vmatprep.subr.bf16.mxu0 0
    %242 = vmatpush1.bf16.msra.mxu0 0
    %243 = vmatprep.subr.bf16.mxu0 0
    %244 = vmatpush1.bf16.msra.mxu0 0
    %245 = vmatprep.subr.bf16.mxu0 0
    %246 = vmatpush1.bf16.msra.mxu0 0
    %247 = vmatprep.subr.bf16.mxu0 0
    %248 = vmatpush1.bf16.msra.mxu0 0
    %249 = vmatprep.subr.bf16.mxu0 0
    %250 = vmatpush1.bf16.msra.mxu0 0
    %251 = vmatprep.subr.bf16.mxu0 0
    %252 = vmatpush1.bf16.msra.mxu0 0
    %253 = vmatprep.subr.bf16.mxu0 0
    %254 = vmatpush1.bf16.msra.mxu0 0
    %255 = vmatprep.subr.bf16.mxu0 0
    %256 = vmatpush1.bf16.msra.mxu0 0
    %257 = vmatprep.subr.bf16.mxu0 0
    %258 = vmatpush1.bf16.msra.mxu0 0
    %259 = vmatprep.subr.bf16.mxu0 0
    %260 = vmatpush1.bf16.msra.mxu0 0
    %261 = vmatprep.subr.bf16.mxu0 0
    %262 = vmatpush1.bf16.msra.mxu0 0
    %263 = vmatprep.subr.bf16.mxu0 0
    %264 = vmatpush1.bf16.msra.mxu0 0
    %265 = vmatprep.subr.bf16.mxu0 0
    %266 = vmatpush1.bf16.msra.mxu0 0
    %267 = vmatprep.mubr.bf16.mxu0 0
    %268 = vmatmul.mubr.bf16.gmra.mrb[0].mxu0 %v231
    %v269 = vpop.f32.mrb[0].mxu0
    %v270 = vadd.f32 %v205, %v269
    %v271 = vpop.f32.mrb[0].mxu0
    %v272 = vpop.f32.mrb[0].mxu0
    %v273 = vadd.f32 %v208, %v272
    %v274 = vpop.f32.mrb[0].mxu0
    %275 = vmatprep.mubr.bf16.mxu0 0
    %276 = vmatmul.mubr.bf16.gmra.mrb[0].mxu0 %v233
    %v277 = vpop.f32.mrb[0].mxu0
    %v278 = vadd.f32 %v213, %v277
    %v279 = vpop.f32.mrb[0].mxu0
    %v280 = vpop.f32.mrb[0].mxu0
    %v281 = vadd.f32 %v216, %v280
    %v282 = vpop.f32.mrb[0].mxu0
    %283 = vdwg.mxu0
    %vm286 = vcmask 1046528
    %v287 = vrot.slane %v134, 1
    %v288 = vrot.slane %v135, 1
    %v289 = vsel %vm286, %v287, %v288
    %v294 = vunpack.c.l.b16 %v40
    %v295 = vunpack.c.l.b16 %v41
    %v296 = vunpack.c.l.b16 %v42
    %v297 = vunpack.c.l.b16 %v43
    %v298 = vpack.c.b16 %v295, %v294
    %v299 = vpack.c.b16 %v297, %v296
    %v303 = vsel %vm60, %v289, 0
    %v306 = vsel %vm60, %v288, 0
    %308 = vmatprep.subr.bf16.mxu0 0
    %309 = vmatpush1.bf16.msra.mxu0 %v298
    %310 = vmatprep.subr.bf16.mxu0 0
    %311 = vmatpush1.bf16.msra.mxu0 %v299
    %312 = vmatprep.subr.bf16.mxu0 0
    %313 = vmatpush1.bf16.msra.mxu0 0
    %314 = vmatprep.subr.bf16.mxu0 0
    %315 = vmatpush1.bf16.msra.mxu0 0
    %316 = vmatprep.subr.bf16.mxu0 0
    %317 = vmatpush1.bf16.msra.mxu0 0
    %318 = vmatprep.subr.bf16.mxu0 0
    %319 = vmatpush1.bf16.msra.mxu0 0
    %320 = vmatprep.subr.bf16.mxu0 0
    %321 = vmatpush1.bf16.msra.mxu0 0
    %322 = vmatprep.subr.bf16.mxu0 0
    %323 = vmatpush1.bf16.msra.mxu0 0
    %324 = vmatprep.subr.bf16.mxu0 0
    %325 = vmatpush1.bf16.msra.mxu0 0
    %326 = vmatprep.subr.bf16.mxu0 0
    %327 = vmatpush1.bf16.msra.mxu0 0
    %328 = vmatprep.subr.bf16.mxu0 0
    %329 = vmatpush1.bf16.msra.mxu0 0
    %330 = vmatprep.subr.bf16.mxu0 0
    %331 = vmatpush1.bf16.msra.mxu0 0
    %332 = vmatprep.subr.bf16.mxu0 0
    %333 = vmatpush1.bf16.msra.mxu0 0
    %334 = vmatprep.subr.bf16.mxu0 0
    %335 = vmatpush1.bf16.msra.mxu0 0
    %336 = vmatprep.subr.bf16.mxu0 0
    %337 = vmatpush1.bf16.msra.mxu0 0
    %338 = vmatprep.subr.bf16.mxu0 0
    %339 = vmatpush1.bf16.msra.mxu0 0
    %340 = vmatprep.mubr.bf16.mxu0 0
    %341 = vmatmul.mubr.bf16.gmra.mrb[0].mxu0 %v303
    %v342 = vpop.f32.mrb[0].mxu0
    %v343 = vadd.f32 0.0, %v342
    %v344 = vpop.f32.mrb[0].mxu0
    %v345 = vpop.f32.mrb[0].mxu0
    %v346 = vadd.f32 0.0, %v345
    %v347 = vpop.f32.mrb[0].mxu0
    %348 = vmatprep.mubr.bf16.mxu0 0
    %349 = vmatmul.mubr.bf16.gmra.mrb[0].mxu0 %v306
    %v350 = vpop.f32.mrb[0].mxu0
    %v351 = vadd.f32 0.0, %v350
    %v352 = vpop.f32.mrb[0].mxu0
    %v353 = vpop.f32.mrb[0].mxu0
    %v354 = vadd.f32 0.0, %v353
    %v355 = vpop.f32.mrb[0].mxu0
    %356 = vdwg.mxu0
    %v357 = vadd.f32 %v270, %v343
    %v358 = vadd.f32 %v273, %v346
    %v359 = vadd.f32 %v278, %v351
    %v360 = vadd.f32 %v281, %v354
    %v361 = vlaneseq
    %v362 = vshrl.u32 %v361, 7
    %v363 = vsub.s32 0, %v362
    %v364 = vrot.slane %v26, %v363
    %v365 = vadd.f32 %v357, %v364
    %v366 = vadd.f32 %v358, %v364
    %v367 = vadd.f32 %v359, %v364
    %v368 = vadd.f32 %v360, %v364
    %v369 = vmax.f32 %v365, 0.0
    %v370 = vmax.f32 %v366, 0.0
    %v371 = vmax.f32 %v367, 0.0
    %v372 = vmax.f32 %v368, 0.0
    %vm377 = vcmask 1046528
    %v378 = vrot.slane %v369, 1
    %v379 = vrot.slane %v370, 1
    %v380 = vsel %vm377, %v378, %v379
    %v381 = vrot.slane %v371, 1
    %v382 = vsel %vm377, %v379, %v381
    %v383 = vrot.slane %v372, 1
    %v384 = vsel %vm377, %v381, %v383
    %v389 = vmax.f32 %v369, %v380
    %v390 = vmax.f32 %v370, %v382
    %v391 = vmax.f32 %v371, %v384
    %v392 = vmax.f32 %v372, %v383
    %vm393 = vcmask 1045504
    %v394 = vrot.slane %v369, 2
    %v395 = vrot.slane %v370, 2
    %v396 = vsel %vm393, %v394, %v395
    %v397 = vrot.slane %v371, 2
    %v398 = vsel %vm393, %v395, %v397
    %v399 = vrot.slane %v372, 2
    %v400 = vsel %vm393, %v397, %v399
    %v405 = vmax.f32 %v389, %v396
    %v406 = vmax.f32 %v390, %v398
    %v407 = vmax.f32 %v391, %v400
    %v408 = vmax.f32 %v392, %v399
    %v409 = vlaneseq
    %v410 = vshrl.u32 %v409, 7
    %v411 = vadd.s32 %v410, 8
    %v412 = vlaneseq
    %v413 = vand.u32 %v412, 127
    %vm414 = vcmp.ge.s32.totalorder %v410, 6
    %vm415 = vcmp.ge.s32.totalorder %v411, 6
    %v416 = vsel %vm414, 1, 0
    %v417 = vsel %vm415, 1, 0
    %v418 = vmul.u32 %v410, 2
    %v419 = vmul.u32 %v411, 2
    %v420 = vmul.u32 %v416, 4
    %v421 = vmul.u32 %v417, 4
    %v422 = vadd.s32 %v418, %v420
    %v423 = vadd.s32 %v419, %v421
    %vm424 = vcmp.eq.s32.totalorder %v413, %v422
    %vm425 = vcmp.eq.s32.totalorder %v413, %v423
    %v426 = vsel %vm424, 1, 0
    %v427 = vsel %vm425, 1, 0
    %v428 = vcvt.s32.f32 %v426
    %v429 = vcvt.s32.f32 %v427
    %v430 = vpack.c.bf16 %v429, %v428
    %v431 = vpack.c.bf16 %v406, %v405
    %v432 = vpack.c.bf16 %v408, %v407
    %vm433 = vcmask 228352
    %v435 = vsel %vm433, %v430, 0
    %v438 = vsel %vm393, %v432, 0
    %440 = vmatprep.subr.bf16.mxu0 0
    %441 = vmatpush1.bf16.msra.mxu0 %v431
    %442 = vmatprep.subr.bf16.mxu0 0
    %443 = vmatpush1.bf16.msra.mxu0 %v438
    %444 = vmatprep.subr.bf16.mxu0 0
    %445 = vmatpush1.bf16.msra.mxu0 0
    %446 = vmatprep.subr.bf16.mxu0 0
    %447 = vmatpush1.bf16.msra.mxu0 0
    %448 = vmatprep.subr.bf16.mxu0 0
    %449 = vmatpush1.bf16.msra.mxu0 0
    %450 = vmatprep.subr.bf16.mxu0 0
    %451 = vmatpush1.bf16.msra.mxu0 0
    %452 = vmatprep.subr.bf16.mxu0 0
    %453 = vmatpush1.bf16.msra.mxu0 0
    %454 = vmatprep.subr.bf16.mxu0 0
    %455 = vmatpush1.bf16.msra.mxu0 0
    %456 = vmatprep.subr.bf16.mxu0 0
    %457 = vmatpush1.bf16.msra.mxu0 0
    %458 = vmatprep.subr.bf16.mxu0 0
    %459 = vmatpush1.bf16.msra.mxu0 0
    %460 = vmatprep.subr.bf16.mxu0 0
    %461 = vmatpush1.bf16.msra.mxu0 0
    %462 = vmatprep.subr.bf16.mxu0 0
    %463 = vmatpush1.bf16.msra.mxu0 0
    %464 = vmatprep.subr.bf16.mxu0 0
    %465 = vmatpush1.bf16.msra.mxu0 0
    %466 = vmatprep.subr.bf16.mxu0 0
    %467 = vmatpush1.bf16.msra.mxu0 0
    %468 = vmatprep.subr.bf16.mxu0 0
    %469 = vmatpush1.bf16.msra.mxu0 0
    %470 = vmatprep.subr.bf16.mxu0 0
    %471 = vmatpush1.bf16.msra.mxu0 0
    %472 = vmatprep.mubr.bf16.mxu0 0
    %473 = vmatmul.mubr.bf16.gmra.mrb[0].mxu0 %v435
    %v474 = vpop.f32.mrb[0].mxu0
    %v475 = vadd.f32 0.0, %v474
    %v476 = vpop.f32.mrb[0].mxu0
    %v477 = vpop.f32.mrb[0].mxu0
    %v478 = vadd.f32 0.0, %v477
    %v479 = vpop.f32.mrb[0].mxu0
    %480 = vdwg.mxu0
    %v481 = vpack.c.bf16 %v478, %v475
    %v482 = vlaneseq
    %v483 = vshrl.u32 %v482, 7
    %v484 = vsub.s32 0, %v483
    %v485 = vrot.slane %v27, %v484
    %v490 = vunpack.c.l.b16 %v44
    %v491 = vunpack.c.l.b16 %v45
    %v492 = vunpack.c.l.b16 %v46
    %v493 = vunpack.c.l.b16 %v47
    %v494 = vpack.c.b16 %v491, %v490
    %v495 = vpack.c.b16 %v493, %v492
    %v499 = vsel %vm60, %v481, 0
    %501 = vmatprep.subr.bf16.mxu0 0
    %502 = vmatpush1.bf16.msra.mxu0 %v494
    %503 = vmatprep.subr.bf16.mxu0 0
    %504 = vmatpush1.bf16.msra.mxu0 %v495
    %505 = vmatprep.subr.bf16.mxu0 0
    %506 = vmatpush1.bf16.msra.mxu0 0
    %507 = vmatprep.subr.bf16.mxu0 0
    %508 = vmatpush1.bf16.msra.mxu0 0
    %509 = vmatprep.subr.bf16.mxu0 0
    %510 = vmatpush1.bf16.msra.mxu0 0
    %511 = vmatprep.subr.bf16.mxu0 0
    %512 = vmatpush1.bf16.msra.mxu0 0
    %513 = vmatprep.subr.bf16.mxu0 0
    %514 = vmatpush1.bf16.msra.mxu0 0
    %515 = vmatprep.subr.bf16.mxu0 0
    %516 = vmatpush1.bf16.msra.mxu0 0
    %517 = vmatprep.subr.bf16.mxu0 0
    %518 = vmatpush1.bf16.msra.mxu0 0
    %519 = vmatprep.subr.bf16.mxu0 0
    %520 = vmatpush1.bf16.msra.mxu0 0
    %521 = vmatprep.subr.bf16.mxu0 0
    %522 = vmatpush1.bf16.msra.mxu0 0
    %523 = vmatprep.subr.bf16.mxu0 0
    %524 = vmatpush1.bf16.msra.mxu0 0
    %525 = vmatprep.subr.bf16.mxu0 0
    %526 = vmatpush1.bf16.msra.mxu0 0
    %527 = vmatprep.subr.bf16.mxu0 0
    %528 = vmatpush1.bf16.msra.mxu0 0
    %529 = vmatprep.subr.bf16.mxu0 0
    %530 = vmatpush1.bf16.msra.mxu0 0
    %531 = vmatprep.subr.bf16.mxu0 0
    %532 = vmatpush1.bf16.msra.mxu0 0
    %533 = vmatprep.mubr.bf16.mxu0 0
    %534 = vmatmul.mubr.bf16.gmra.mrb[0].mxu0 %v499
    %v535 = vpop.f32.mrb[0].mxu0
    %v536 = vadd.f32 %v485, %v535
    %v537 = vpop.f32.mrb[0].mxu0
    %v538 = vpop.f32.mrb[0].mxu0
    %v539 = vadd.f32 %v485, %v538
    %v540 = vpop.f32.mrb[0].mxu0
    %541 = vdwg.mxu0
    %v542 = vmax.f32 %v536, 0.0
    %v543 = vmax.f32 %v539, 0.0
    %v546 = vrot.slane %v542, 1
    %v547 = vrot.slane %v543, 1
    %v548 = vsel %vm377, %v546, %v547
    %v551 = vmax.f32 %v542, %v548
    %v552 = vmax.f32 %v543, %v547
    %v553 = vmul.u32 %v410, 6
    %v554 = vsub.s32 %v413, %v553
    %vm555 = vcmp.ge.s32.totalorder %v554, 0
    %vm556 = vcmp.lt.s32.totalorder %v554, 6
    %vm557 = vmand %vm555, %vm556
    %v558 = vand.u32 %v554, 1
    %vm559 = vcmp.eq.s32.totalorder %v558, 0
    %vm560 = vmand %vm557, %vm559
    %v561 = vsel %vm560, 1, 0
    %v562 = vcvt.s32.f32 %v561
    %v563 = vpack.c.bf16 %v562, %v562
    %v564 = vpack.c.bf16 %v552, %v551
    %vm565 = vcmask 89088
    %v567 = vsel %vm565, %v563, 0
    %vm569 = vcmask 1044480
    %v570 = vsel %vm569, 4294967295, 65535
    %v571 = vsel %vm393, %v570, 0
    %v573 = vand.u32 %v564, %v571
    %575 = vmatprep.subr.bf16.mxu0 0
    %576 = vmatpush1.bf16.msra.mxu0 %v573
    %577 = vmatprep.subr.bf16.mxu0 0
    %578 = vmatpush1.bf16.msra.mxu0 0
    %579 = vmatprep.subr.bf16.mxu0 0
    %580 = vmatpush1.bf16.msra.mxu0 0
    %581 = vmatprep.subr.bf16.mxu0 0
    %582 = vmatpush1.bf16.msra.mxu0 0
    %583 = vmatprep.subr.bf16.mxu0 0
    %584 = vmatpush1.bf16.msra.mxu0 0
    %585 = vmatprep.subr.bf16.mxu0 0
    %586 = vmatpush1.bf16.msra.mxu0 0
    %587 = vmatprep.subr.bf16.mxu0 0
    %588 = vmatpush1.bf16.msra.mxu0 0
    %589 = vmatprep.subr.bf16.mxu0 0
    %590 = vmatpush1.bf16.msra.mxu0 0
    %591 = vmatprep.subr.bf16.mxu0 0
    %592 = vmatpush1.bf16.msra.mxu0 0
    %593 = vmatprep.subr.bf16.mxu0 0
    %594 = vmatpush1.bf16.msra.mxu0 0
    %595 = vmatprep.subr.bf16.mxu0 0
    %596 = vmatpush1.bf16.msra.mxu0 0
    %597 = vmatprep.subr.bf16.mxu0 0
    %598 = vmatpush1.bf16.msra.mxu0 0
    %599 = vmatprep.subr.bf16.mxu0 0
    %600 = vmatpush1.bf16.msra.mxu0 0
    %601 = vmatprep.subr.bf16.mxu0 0
    %602 = vmatpush1.bf16.msra.mxu0 0
    %603 = vmatprep.subr.bf16.mxu0 0
    %604 = vmatpush1.bf16.msra.mxu0 0
    %605 = vmatprep.subr.bf16.mxu0 0
    %606 = vmatpush1.bf16.msra.mxu0 0
    %607 = vmatprep.mubr.bf16.mxu0 0
    %608 = vmatmul.mubr.bf16.gmra.mrb[0].mxu0 %v567
    %v609 = vpop.f32.mrb[0].mxu0
    %v610 = vadd.f32 0.0, %v609
    %v611 = vpop.f32.mrb[0].mxu0
    %v612 = vpop.f32.mrb[0].mxu0
    %v613 = vpop.f32.mrb[0].mxu0
    %614 = vdwg.mxu0
    %v616 = vsel %vm60, %v24, 0
    %618 = vmatprep.subr.mxu0 0.0
    %619 = vmatpush1.msra.mxu0 %v13
    %620 = vmatprep.subr.mxu0 0.0
    %621 = vmatpush1.msra.mxu0 %v14
    %622 = vmatprep.subr.mxu0 0.0
    %623 = vmatpush1.msra.mxu0 %v15
    %624 = vmatprep.subr.mxu0 0.0
    %625 = vmatpush1.msra.mxu0 %v16
    %626 = vmatprep.subr.mxu0 0.0
    %627 = vmatpush1.msra.mxu0 0.0
    %628 = vmatprep.subr.mxu0 0.0
    %629 = vmatpush1.msra.mxu0 0.0
    %630 = vmatprep.subr.mxu0 0.0
    %631 = vmatpush1.msra.mxu0 0.0
    %632 = vmatprep.subr.mxu0 0.0
    %633 = vmatpush1.msra.mxu0 0.0
    %634 = vmatprep.subr.mxu0 0.0
    %635 = vmatpush1.msra.mxu0 0.0
    %636 = vmatprep.subr.mxu0 0.0
    %637 = vmatpush1.msra.mxu0 0.0
    %638 = vmatprep.subr.mxu0 0.0
    %639 = vmatpush1.msra.mxu0 0.0
    %640 = vmatprep.subr.mxu0 0.0
    %641 = vmatpush1.msra.mxu0 0.0
    %642 = vmatprep.subr.mxu0 0.0
    %643 = vmatpush1.msra.mxu0 0.0
    %644 = vmatprep.subr.mxu0 0.0
    %645 = vmatpush1.msra.mxu0 0.0
    %646 = vmatprep.subr.mxu0 0.0
    %647 = vmatpush1.msra.mxu0 0.0
    %648 = vmatprep.subr.mxu0 0.0
    %649 = vmatpush1.msra.mxu0 0.0
    %650 = vmatprep.subr.mxu0 0.0
    %651 = vmatpush1.msra.mxu0 0.0
    %652 = vmatprep.subr.mxu0 0.0
    %653 = vmatpush1.msra.mxu0 0.0
    %654 = vmatprep.subr.mxu0 0.0
    %655 = vmatpush1.msra.mxu0 0.0
    %656 = vmatprep.subr.mxu0 0.0
    %657 = vmatpush1.msra.mxu0 0.0
    %658 = vmatprep.subr.mxu0 0.0
    %659 = vmatpush1.msra.mxu0 0.0
    %660 = vmatprep.subr.mxu0 0.0
    %661 = vmatpush1.msra.mxu0 0.0
    %662 = vmatprep.subr.mxu0 0.0
    %663 = vmatpush1.msra.mxu0 0.0
    %664 = vmatprep.subr.mxu0 0.0
    %665 = vmatpush1.msra.mxu0 0.0
    %666 = vmatprep.subr.mxu0 0.0
    %667 = vmatpush1.msra.mxu0 0.0
    %668 = vmatprep.subr.mxu0 0.0
    %669 = vmatpush1.msra.mxu0 0.0
    %670 = vmatprep.subr.mxu0 0.0
    %671 = vmatpush1.msra.mxu0 0.0
    %672 = vmatprep.subr.mxu0 0.0
    %673 = vmatpush1.msra.mxu0 0.0
    %674 = vmatprep.subr.mxu0 0.0
    %675 = vmatpush1.msra.mxu0 0.0
    %676 = vmatprep.subr.mxu0 0.0
    %677 = vmatpush1.msra.mxu0 0.0
    %678 = vmatprep.subr.mxu0 0.0
    %679 = vmatpush1.msra.mxu0 0.0
    %680 = vmatprep.subr.mxu0 0.0
    %681 = vmatpush1.msra.mxu0 0.0
    %682 = vmatprep.mubr.f32.mxu0 0.0
    %683 = vmatmul.mubr.f32.gmra.mrb[0].mxu0 %v616
    %v684 = vpop.f32.mrb[0].mxu0
    %v685 = vadd.f32 %v21, %v684
    %v686 = vpop.f32.mrb[0].mxu0
    %687 = vdwg.mxu0
    %vm688 = vcmask 48128
    %v690 = vsel %vm688, %v25, 0
    %v693 = vsel %vm393, %v685, 0
    %695 = vmatprep.subr.mxu0 0.0
    %696 = vmatpush1.msra.mxu0 %v693
    %697 = vmatprep.subr.mxu0 0.0
    %698 = vmatpush1.msra.mxu0 0.0
    %699 = vmatprep.subr.mxu0 0.0
    %700 = vmatpush1.msra.mxu0 0.0
    %701 = vmatprep.subr.mxu0 0.0
    %702 = vmatpush1.msra.mxu0 0.0
    %703 = vmatprep.subr.mxu0 0.0
    %704 = vmatpush1.msra.mxu0 0.0
    %705 = vmatprep.subr.mxu0 0.0
    %706 = vmatpush1.msra.mxu0 0.0
    %707 = vmatprep.subr.mxu0 0.0
    %708 = vmatpush1.msra.mxu0 0.0
    %709 = vmatprep.subr.mxu0 0.0
    %710 = vmatpush1.msra.mxu0 0.0
    %711 = vmatprep.subr.mxu0 0.0
    %712 = vmatpush1.msra.mxu0 0.0
    %713 = vmatprep.subr.mxu0 0.0
    %714 = vmatpush1.msra.mxu0 0.0
    %715 = vmatprep.subr.mxu0 0.0
    %716 = vmatpush1.msra.mxu0 0.0
    %717 = vmatprep.subr.mxu0 0.0
    %718 = vmatpush1.msra.mxu0 0.0
    %719 = vmatprep.subr.mxu0 0.0
    %720 = vmatpush1.msra.mxu0 0.0
    %721 = vmatprep.subr.mxu0 0.0
    %722 = vmatpush1.msra.mxu0 0.0
    %723 = vmatprep.subr.mxu0 0.0
    %724 = vmatpush1.msra.mxu0 0.0
    %725 = vmatprep.subr.mxu0 0.0
    %726 = vmatpush1.msra.mxu0 0.0
    %727 = vmatprep.subr.mxu0 0.0
    %728 = vmatpush1.msra.mxu0 0.0
    %729 = vmatprep.subr.mxu0 0.0
    %730 = vmatpush1.msra.mxu0 0.0
    %731 = vmatprep.subr.mxu0 0.0
    %732 = vmatpush1.msra.mxu0 0.0
    %733 = vmatprep.subr.mxu0 0.0
    %734 = vmatpush1.msra.mxu0 0.0
    %735 = vmatprep.subr.mxu0 0.0
    %736 = vmatpush1.msra.mxu0 0.0
    %737 = vmatprep.subr.mxu0 0.0
    %738 = vmatpush1.msra.mxu0 0.0
    %739 = vmatprep.subr.mxu0 0.0
    %740 = vmatpush1.msra.mxu0 0.0
    %741 = vmatprep.subr.mxu0 0.0
    %742 = vmatpush1.msra.mxu0 0.0
    %743 = vmatprep.subr.mxu0 0.0
    %744 = vmatpush1.msra.mxu0 0.0
    %745 = vmatprep.subr.mxu0 0.0
    %746 = vmatpush1.msra.mxu0 0.0
    %747 = vmatprep.subr.mxu0 0.0
    %748 = vmatpush1.msra.mxu0 0.0
    %749 = vmatprep.subr.mxu0 0.0
    %750 = vmatpush1.msra.mxu0 0.0
    %751 = vmatprep.subr.mxu0 0.0
    %752 = vmatpush1.msra.mxu0 0.0
    %753 = vmatprep.subr.mxu0 0.0
    %754 = vmatpush1.msra.mxu0 0.0
    %755 = vmatprep.subr.mxu0 0.0
    %756 = vmatpush1.msra.mxu0 0.0
    %757 = vmatprep.subr.mxu0 0.0
    %758 = vmatpush1.msra.mxu0 0.0
    %759 = vmatprep.mubr.f32.mxu0 0.0
    %760 = vmatmul.mubr.f32.gmra.mrb[0].mxu0 %v690
    %v761 = vpop.f32.mrb[0].mxu0
    %v762 = vadd.f32 0.0, %v761
    %v763 = vpop.f32.mrb[0].mxu0
    %764 = vdwg.mxu0
    %v765 = vpack.c.bf16 %v22, %v22
    %v766 = vlaneseq
    %v767 = vshrl.u32 %v766, 7
    %v768 = vsub.s32 0, %v767
    %v769 = vrot.slane %v28, %v768
    %v774 = vunpack.c.l.b16 %v48
    %v775 = vunpack.c.l.b16 %v49
    %v776 = vunpack.c.l.b16 %v50
    %v777 = vunpack.c.l.b16 %v51
    %v778 = vpack.c.b16 %v775, %v774
    %v779 = vpack.c.b16 %v777, %v776
    %v783 = vsel %vm60, %v765, 0
    %785 = vmatprep.subr.bf16.mxu0 0
    %786 = vmatpush1.bf16.msra.mxu0 %v778
    %787 = vmatprep.subr.bf16.mxu0 0
    %788 = vmatpush1.bf16.msra.mxu0 %v779
    %789 = vmatprep.subr.bf16.mxu0 0
    %790 = vmatpush1.bf16.msra.mxu0 0
    %791 = vmatprep.subr.bf16.mxu0 0
    %792 = vmatpush1.bf16.msra.mxu0 0
    %793 = vmatprep.subr.bf16.mxu0 0
    %794 = vmatpush1.bf16.msra.mxu0 0
    %795 = vmatprep.subr.bf16.mxu0 0
    %796 = vmatpush1.bf16.msra.mxu0 0
    %797 = vmatprep.subr.bf16.mxu0 0
    %798 = vmatpush1.bf16.msra.mxu0 0
    %799 = vmatprep.subr.bf16.mxu0 0
    %800 = vmatpush1.bf16.msra.mxu0 0
    %801 = vmatprep.subr.bf16.mxu0 0
    %802 = vmatpush1.bf16.msra.mxu0 0
    %803 = vmatprep.subr.bf16.mxu0 0
    %804 = vmatpush1.bf16.msra.mxu0 0
    %805 = vmatprep.subr.bf16.mxu0 0
    %806 = vmatpush1.bf16.msra.mxu0 0
    %807 = vmatprep.subr.bf16.mxu0 0
    %808 = vmatpush1.bf16.msra.mxu0 0
    %809 = vmatprep.subr.bf16.mxu0 0
    %810 = vmatpush1.bf16.msra.mxu0 0
    %811 = vmatprep.subr.bf16.mxu0 0
    %812 = vmatpush1.bf16.msra.mxu0 0
    %813 = vmatprep.subr.bf16.mxu0 0
    %814 = vmatpush1.bf16.msra.mxu0 0
    %815 = vmatprep.subr.bf16.mxu0 0
    %816 = vmatpush1.bf16.msra.mxu0 0
    %817 = vmatprep.mubr.bf16.mxu0 0
    %818 = vmatmul.mubr.bf16.gmra.mrb[0].mxu0 %v783
    %v819 = vpop.f32.mrb[0].mxu0
    %v820 = vadd.f32 %v769, %v819
    %v821 = vpop.f32.mrb[0].mxu0
    %v822 = vpop.f32.mrb[0].mxu0
    %v823 = vpop.f32.mrb[0].mxu0
    %824 = vdwg.mxu0
    %v825 = vpack.c.bf16 %v762, %v762
    %v826 = vlaneseq
    %v827 = vshrl.u32 %v826, 7
    %v828 = vsub.s32 0, %v827
    %v829 = vrot.slane %v29, %v828
    %v834 = vunpack.c.l.b16 %v52
    %v835 = vunpack.c.l.b16 %v53
    %v836 = vunpack.c.l.b16 %v54
    %v837 = vunpack.c.l.b16 %v55
    %v838 = vpack.c.b16 %v835, %v834
    %v839 = vpack.c.b16 %v837, %v836
    %v843 = vsel %vm60, %v825, 0
    %845 = vmatprep.subr.bf16.mxu0 0
    %846 = vmatpush1.bf16.msra.mxu0 %v838
    %847 = vmatprep.subr.bf16.mxu0 0
    %848 = vmatpush1.bf16.msra.mxu0 %v839
    %849 = vmatprep.subr.bf16.mxu0 0
    %850 = vmatpush1.bf16.msra.mxu0 0
    %851 = vmatprep.subr.bf16.mxu0 0
    %852 = vmatpush1.bf16.msra.mxu0 0
    %853 = vmatprep.subr.bf16.mxu0 0
    %854 = vmatpush1.bf16.msra.mxu0 0
    %855 = vmatprep.subr.bf16.mxu0 0
    %856 = vmatpush1.bf16.msra.mxu0 0
    %857 = vmatprep.subr.bf16.mxu0 0
    %858 = vmatpush1.bf16.msra.mxu0 0
    %859 = vmatprep.subr.bf16.mxu0 0
    %860 = vmatpush1.bf16.msra.mxu0 0
    %861 = vmatprep.subr.bf16.mxu0 0
    %862 = vmatpush1.bf16.msra.mxu0 0
    %863 = vmatprep.subr.bf16.mxu0 0
    %864 = vmatpush1.bf16.msra.mxu0 0
    %865 = vmatprep.subr.bf16.mxu0 0
    %866 = vmatpush1.bf16.msra.mxu0 0
    %867 = vmatprep.subr.bf16.mxu0 0
    %868 = vmatpush1.bf16.msra.mxu0 0
    %869 = vmatprep.subr.bf16.mxu0 0
    %870 = vmatpush1.bf16.msra.mxu0 0
    %871 = vmatprep.subr.bf16.mxu0 0
    %872 = vmatpush1.bf16.msra.mxu0 0
    %873 = vmatprep.subr.bf16.mxu0 0
    %874 = vmatpush1.bf16.msra.mxu0 0
    %875 = vmatprep.subr.bf16.mxu0 0
    %876 = vmatpush1.bf16.msra.mxu0 0
    %877 = vmatprep.mubr.bf16.mxu0 0
    %878 = vmatmul.mubr.bf16.gmra.mrb[0].mxu0 %v843
    %v879 = vpop.f32.mrb[0].mxu0
    %v880 = vadd.f32 %v829, %v879
    %v881 = vpop.f32.mrb[0].mxu0
    %v882 = vpop.f32.mrb[0].mxu0
    %v883 = vpop.f32.mrb[0].mxu0
    %884 = vdwg.mxu0
    %v885 = vmul.f32 %v131, %v610
    %v886 = vmul.f32 %v885, %v820
    %v887 = vmul.f32 %v886, %v880
    %v889 = vrot.slane %v131, 6
    %vm891 = vcmask 1041408
    %v892 = vsel %vm891, %v887, %v889
    %v893 = vpack.c.bf16 %v892, %v892
    %v894 = vlaneseq
    %v895 = vshrl.u32 %v894, 7
    %v896 = vsub.s32 0, %v895
    %v897 = vrot.slane %v30, %v896
    %v902 = vunpack.c.l.b16 %v56
    %v903 = vunpack.c.l.b16 %v57
    %v904 = vunpack.c.l.b16 %v58
    %v905 = vunpack.c.l.b16 %v59
    %v906 = vpack.c.b16 %v903, %v902
    %v907 = vpack.c.b16 %v905, %v904
    %v911 = vsel %vm60, %v893, 0
    %913 = vmatprep.subr.bf16.mxu0 0
    %914 = vmatpush1.bf16.msra.mxu0 %v906
    %915 = vmatprep.subr.bf16.mxu0 0
    %916 = vmatpush1.bf16.msra.mxu0 %v907
    %917 = vmatprep.subr.bf16.mxu0 0
    %918 = vmatpush1.bf16.msra.mxu0 0
    %919 = vmatprep.subr.bf16.mxu0 0
    %920 = vmatpush1.bf16.msra.mxu0 0
    %921 = vmatprep.subr.bf16.mxu0 0
    %922 = vmatpush1.bf16.msra.mxu0 0
    %923 = vmatprep.subr.bf16.mxu0 0
    %924 = vmatpush1.bf16.msra.mxu0 0
    %925 = vmatprep.subr.bf16.mxu0 0
    %926 = vmatpush1.bf16.msra.mxu0 0
    %927 = vmatprep.subr.bf16.mxu0 0
    %928 = vmatpush1.bf16.msra.mxu0 0
    %929 = vmatprep.subr.bf16.mxu0 0
    %930 = vmatpush1.bf16.msra.mxu0 0
    %931 = vmatprep.subr.bf16.mxu0 0
    %932 = vmatpush1.bf16.msra.mxu0 0
    %933 = vmatprep.subr.bf16.mxu0 0
    %934 = vmatpush1.bf16.msra.mxu0 0
    %935 = vmatprep.subr.bf16.mxu0 0
    %936 = vmatpush1.bf16.msra.mxu0 0
    %937 = vmatprep.subr.bf16.mxu0 0
    %938 = vmatpush1.bf16.msra.mxu0 0
    %939 = vmatprep.subr.bf16.mxu0 0
    %940 = vmatpush1.bf16.msra.mxu0 0
    %941 = vmatprep.subr.bf16.mxu0 0
    %942 = vmatpush1.bf16.msra.mxu0 0
    %943 = vmatprep.subr.bf16.mxu0 0
    %944 = vmatpush1.bf16.msra.mxu0 0
    %945 = vmatprep.mubr.bf16.mxu0 0
    %946 = vmatmul.mubr.bf16.gmra.mrb[0].mxu0 %v911
    %v947 = vpop.f32.mrb[0].mxu0
    %v948 = vadd.f32 %v897, %v947
    %v949 = vpop.f32.mrb[0].mxu0
    %v950 = vpop.f32.mrb[0].mxu0
    %v951 = vpop.f32.mrb[0].mxu0
    %952 = vdwg.mxu0
    %vm953 = vcmask 9216
    %v954 = vsel %vm953, %v948, -inf
    %955 = vmax.xlane.f32.xlu0 %v954
    %v956 = vpop.xlane.xlu0 %955
    %v957 = vsub.f32 %v948, %v956
    %v958 = vmul.f32 %v957, 1.442695
    %v959 = vpow.pop %v958
    %v960 = vsel %vm953, %v959, 0.0
    %961 = vadd.xlane.f32.xlu0 %v960
    %v962 = vpop.xlane.xlu0 %961
    %v963 = vlog2.pop %v962
    %v964 = vmul.f32 %v963, 0.6931472
    %v965 = vsub.f32 %v957, %v964
    %vm966 = vcmask 11266
    %v967 = vsel %vm966, %v948, -inf
    %968 = vmax.xlane.f32.xlu0 %v967
    %v969 = vpop.xlane.xlu0 %968
    %v970 = vsub.f32 %v948, %v969
    %v971 = vmul.f32 %v970, 1.442695
    %v972 = vpow.pop %v971
    %v973 = vsel %vm966, %v972, 0.0
    %974 = vadd.xlane.f32.xlu0 %v973
    %v975 = vpop.xlane.xlu0 %974
    %v976 = vlog2.pop %v975
    %v977 = vmul.f32 %v976, 0.6931472
    %v978 = vsub.f32 %v970, %v977
    %v979 = vmul.f32 %v965, 1.442695
    %v980 = vpow.pop %v979
    %v981 = vmul.f32 %v978, 1.442695
    %v982 = vpow.pop %v981
    %v983 = vmul.f32 %v31, %v965
    %v984 = vsel %vm953, %v983, 0.0
    %985 = vadd.xlane.f32.xlu0 %v984
    %v986 = vpop.xlane.xlu0 %985
    %v987 = vrot.slane %v986, 4
    %v988 = vadd.f32 %v986, %v987
    %v989 = vrot.slane %v988, 2
    %v990 = vadd.f32 %v988, %v989
    %v991 = vrot.slane %v990, 1
    %v992 = vadd.f32 %v990, %v991
    %s993 = vtos %v992
    %v994 = vstv %s993
    %v995 = vsub.f32 0.0, %v994
    %v997 = vrot.slane %v978, 2
    %v999 = vmul.f32 %v31, %v997
    %v1000 = vsel %vm953, %v999, 0.0
    %1001 = vadd.xlane.f32.xlu0 %v1000
    %v1002 = vpop.xlane.xlu0 %1001
    %v1003 = vrot.slane %v1002, 4
    %v1004 = vadd.f32 %v1002, %v1003
    %v1005 = vrot.slane %v1004, 2
    %v1006 = vadd.f32 %v1004, %v1005
    %v1007 = vrot.slane %v1006, 1
    %v1008 = vadd.f32 %v1006, %v1007
    %s1009 = vtos %v1008
    %v1010 = vstv %s1009
    %v1011 = vsub.f32 %v995, %v1010
    %v1012 = vrcp.pop 4.0
    %v1013 = vmul.f32 %v1011, %v1012
    %v1015 = vrot.slane %v965, 6
    %v1017 = vsub.f32 %v978, %v1015
    %v1018 = vmul.f32 %v982, %v1017
    %v1020 = vrot.slane %v1018, 2
    %v1022 = vsel %vm953, %v1020, 0.0
    %1023 = vadd.xlane.f32.xlu0 %v1022
    %v1024 = vpop.xlane.xlu0 %1023
    %v1025 = vrot.slane %v1024, 4
    %v1026 = vadd.f32 %v1024, %v1025
    %v1027 = vrot.slane %v1026, 2
    %v1028 = vadd.f32 %v1026, %v1027
    %v1029 = vrot.slane %v1028, 1
    %v1030 = vadd.f32 %v1028, %v1029
    %s1031 = vtos %v1030
    %v1032 = vstv %s1031
    %v1033 = vsub.f32 %v965, %v997
    %v1034 = vmul.f32 %v980, %v1033
    %v1035 = vsel %vm953, %v1034, 0.0
    %1036 = vadd.xlane.f32.xlu0 %v1035
    %v1037 = vpop.xlane.xlu0 %1036
    %v1038 = vrot.slane %v1037, 4
    %v1039 = vadd.f32 %v1037, %v1038
    %v1040 = vrot.slane %v1039, 2
    %v1041 = vadd.f32 %v1039, %v1040
    %v1042 = vrot.slane %v1041, 1
    %v1043 = vadd.f32 %v1041, %v1042
    %s1044 = vtos %v1043
    %v1045 = vstv %s1044
    %v1046 = vadd.f32 %v1032, %v1045
    %v1047 = vmul.f32 %v1046, 0.5
    %v1048 = vmul.f32 %v1047, 0.1
    %v1049 = vadd.f32 %v1013, %v1048
    %1050 = vst [vmem:[#allocation2] sm:$0xff] 0.0
    %1051 = vst.msk [vmem:[#allocation2] sm:$0x3] %vm953, %v980
    %vm1052 = vcmask 8192
    %1053 = vst.msk [vmem:[#allocation2 + $0x2] sm:$0x1] %vm1052, %v1049
    // Predicated region
    $region10: #{tpu_custom_call.1} parent=1 // pred_check
      _
    $region11: #{tpu_custom_call.1} parent=1 // pred_check_branch
      %1055 = sbr.rel (0) target = $region13
    $region12: #{tpu_custom_call.1} parent=1 // pred_region
      %s1057 = ssub.s32 128, 128
      %1058 = vsyncadd [#allocation3], %s1057
      %s1060 = sshll.u32 [#allocation2], 4
      %s1061 = int_to_ptr.vmem [resolvable:$true] %s1060
      %1063 = dma.vmem_to_hbm [thread:$0]  %s1061, 128, %s2, [#allocation3]
    $region13: #{tpu_custom_call.1} parent=1 // pred_fallthru
      _
    // Predicated region
    $region14: #{tpu_custom_call.1} parent=1 // pred_check
      _
    $region15: #{tpu_custom_call.1} parent=1 // pred_check_branch
      %1065 = sbr.rel (0) target = $region17
    $region16: #{tpu_custom_call.1} parent=1 // pred_region
      %1066 = dma.done [#allocation3], 128
    $region17: #{tpu_custom_call.1} parent=1 // pred_fallthru
      _
    %1067 = vsyncpa [#allocation3], 1

</llo_original>
